<compile_context>
chip_gen: v7x
topology: tpu7x:2x2x1
jax: 0.10.0
libtpu: 0.0.40
codegen_flags: <defaults>
</compile_context>

<pallas_src>
import functools

import jax
import jax.numpy as jnp
from jax.experimental import pallas as pl
from jax.experimental.pallas import tpu as pltpu

_LANE = 128


def _round_up(x, m):
    return ((x + m - 1) // m) * m


def _pad2(a, rows, cols):
    r, c = a.shape
    return jnp.pad(a, ((0, rows - r), (0, cols - c)))


def _dqn_kernel(x_ref, w1_ref, b1_ref, w2_ref, b2_ref, w3_ref, b3_ref, out_ref):
    cdt = x_ref.dtype  # compute dtype of the streamed operand (f32 or bf16)
    # fc1 + ReLU   (K = state_size, N = 128-padded hidden), f32 accumulation.
    h = jnp.dot(x_ref[...], w1_ref[...], preferred_element_type=jnp.float32)
    h = jnp.maximum(h + b1_ref[...], 0.0).astype(cdt)
    # fc2 + ReLU   (lane-dense 128 x 128 contraction on the MXU).
    h = jnp.dot(h, w2_ref[...], preferred_element_type=jnp.float32)
    h = jnp.maximum(h + b2_ref[...], 0.0).astype(cdt)
    # fc3 (no activation) — output kept at the true action width A (masked vst;
    # store/VPU slots have huge slack at these shapes, HBM bytes dominate).
    q = jnp.dot(h, w3_ref[...], preferred_element_type=jnp.float32)
    out_ref[...] = (q + b3_ref[...]).astype(out_ref.dtype)
    # TODO(synk): if the consumer is greedy action selection, fuse the per-row
    # max/argmax over actions here and emit (TB, 1) instead of raw Q-values.


@functools.partial(jax.jit, static_argnames=("block_b",))
def dqn_forward(x, w1, b1, w2, b2, w3, b3, *, block_b=8192):
    """Q-values for a batch of states. x: (B, S); weights (in, out)-transposed."""
    B, S = x.shape
    H = w1.shape[1]
    A = w3.shape[1]
    cdt = x.dtype                      # pass bf16 states for the bandwidth win
    itemsize = jnp.dtype(cdt).itemsize

    b1 = b1.reshape(1, -1)
    b2 = b2.reshape(1, -1)
    b3 = b3.reshape(1, -1)

    # Hidden dim padded to a full 128-lane tile (exact: zero pads stay zero).
    Hp = _round_up(max(H, _LANE), _LANE)

    # Batch tile: multiple of 8 sublanes, target >= ~4 grid steps when B allows
    # (v7x megacore + pipelining), capped at block_b rows so live VMEM
    # (~1 KiB/row of f32 intermediates + small double-buffered x/out tiles)
    # stays well under the 32 MiB default scoped limit on every generation.
    TB = min(block_b, max(8, _round_up(pl.cdiv(B, 4), 8)))
    grid = (pl.cdiv(B, TB),)           # ragged last tile handled by masked DMA

    w1p = _pad2(w1, S, Hp).astype(cdt)
    b1p = _pad2(b1, 1, Hp)             # biases stay f32 (added after f32 acc)
    w2p = _pad2(w2, Hp, Hp).astype(cdt)
    b2p = _pad2(b2, 1, Hp)
    w3p = _pad2(w3, Hp, A).astype(cdt)  # action dim NOT padded: output is (B, A)
    b3p = b3

    x_spec = pl.BlockSpec((TB, S), lambda i: (i, 0))
    out_spec = pl.BlockSpec((TB, A), lambda i: (i, 0))
    # Weights/biases: constant block index -> VMEM-resident across the grid.
    # (pipeline_mode=pl.Buffered(1) would drop their second buffer; skipped as
    #  pure hygiene — they total ~70-140 KiB.)
    res = lambda shape: pl.BlockSpec(shape, lambda i: (0, 0))

    flops = 2 * B * (S * Hp + Hp * Hp + Hp * A)
    bytes_accessed = (B * S * itemsize            # streamed x
                      + B * A * 4                 # streamed (unpadded) output
                      + (S * Hp + Hp * Hp + Hp * A) * itemsize
                      + (2 * Hp + A) * 4)         # biases

    return pl.pallas_call(
        _dqn_kernel,
        out_shape=jax.ShapeDtypeStruct((B, A), jnp.float32),
        grid=grid,
        in_specs=[
            x_spec,
            res((S, Hp)), res((1, Hp)),
            res((Hp, Hp)), res((1, Hp)),
            res((Hp, A)), res((1, A)),
        ],
        out_specs=out_spec,
        compiler_params=pltpu.CompilerParams(
            dimension_semantics=("parallel",),    # megacore sharding on v7x
        ),
        cost_estimate=pl.CostEstimate(
            flops=flops, transcendentals=0, bytes_accessed=bytes_accessed),
    )(x, w1p, b1p, w2p, b2p, w3p, b3p)


def init_params(key, state_size, action_size, hidden_size=64):
    """Mimics PyTorch nn.Linear default init: U(-1/sqrt(fan_in), +1/sqrt(fan_in))."""
    def linear(key, fan_in, fan_out):
        kw, kb = jax.random.split(key)
        bound = 1.0 / jnp.sqrt(fan_in)
        w = jax.random.uniform(kw, (fan_in, fan_out), jnp.float32, -bound, bound)
        b = jax.random.uniform(kb, (1, fan_out), jnp.float32, -bound, bound)
        return w, b

    k1, k2, k3 = jax.random.split(key, 3)
    w1, b1 = linear(k1, state_size, hidden_size)
    w2, b2 = linear(k2, hidden_size, hidden_size)
    w3, b3 = linear(k3, hidden_size, action_size)
    return w1, b1, w2, b2, w3, b3


if __name__ == "__main__":
    key = jax.random.PRNGKey(0)
    k_params, k_state = jax.random.split(key)

    batch = 2
    state_size = 8
    action_size = 4
    hidden_size = 64

    params = init_params(k_params, state_size, action_size, hidden_size)
    state = jax.random.normal(k_state, (batch, state_size), jnp.float32)

    w1, b1, w2, b2, w3, b3 = params

    def ref_fwd(s):
        h = jnp.maximum(s @ w1 + b1, 0.0)
        h = jnp.maximum(h @ w2 + b2, 0.0)
        return h @ w3 + b3

    # Small batch, f32 path.
    q_values = dqn_forward(state, *params)
    jax.block_until_ready(q_values)
    assert q_values.shape == (batch, action_size)
    # MXU default precision may run f32 matmuls as bf16 passes (both in the
    # kernel and in XLA's reference), so compare with a tolerance that covers
    # either lowering. Pass precision=HIGHEST on the dots if exact fp32 parity
    # with PyTorch is required (cheap — the kernel is memory-bound).
    assert jnp.allclose(q_values, ref_fwd(state), atol=1e-2, rtol=1e-2)

    # Larger, non-divisible batch: multi-step grid + ragged last tile.
    big_state = jax.random.normal(jax.random.PRNGKey(1), (1000, state_size),
                                  jnp.float32)
    q_big = dqn_forward(big_state, *params)
    jax.block_until_ready(q_big)
    assert q_big.shape == (1000, action_size)
    assert jnp.allclose(q_big, ref_fwd(big_state), atol=1e-2, rtol=1e-2)

    # bf16-streamed variant (halves x HBM traffic; biggest win on v5e).
    q_bf16 = dqn_forward(big_state.astype(jnp.bfloat16), *params)
    jax.block_until_ready(q_bf16)
    assert q_bf16.shape == (1000, action_size)
    assert q_bf16.dtype == jnp.float32
    assert jnp.allclose(q_bf16, ref_fwd(big_state), atol=5e-2, rtol=5e-2)

    print("KERNEL_OK")
</pallas_src>

<mosaic_0001>
module attributes {stable_mosaic.version = 11 : i64} {
  func.func @_dqn_kernel(%arg0: i32, %arg1: memref<8x8xf32, #tpu.memory_space<vmem>>, %arg2: memref<8x128xf32, #tpu.memory_space<vmem>>, %arg3: memref<1x128xf32, #tpu.memory_space<vmem>>, %arg4: memref<128x128xf32, #tpu.memory_space<vmem>>, %arg5: memref<1x128xf32, #tpu.memory_space<vmem>>, %arg6: memref<128x4xf32, #tpu.memory_space<vmem>>, %arg7: memref<1x4xf32, #tpu.memory_space<vmem>>, %arg8: memref<8x4xf32, #tpu.memory_space<vmem>>) attributes {dimension_semantics = [#tpu.dimension_semantics<parallel>], iteration_bounds = array<i64: 1>, scalar_prefetch = 0 : i64, scratch_operands = 0 : i64, tpu.core_type = #tpu.core_type<tc>, window_params = [{transform_indices = @transform_0, window_bounds = array<i64: 8, 8>}, {pipeline_mode = #tpu.pipeline_mode<synchronous>, transform_indices = @transform_1, window_bounds = array<i64: 8, 128>}, {pipeline_mode = #tpu.pipeline_mode<synchronous>, transform_indices = @transform_2, window_bounds = array<i64: 1, 128>}, {pipeline_mode = #tpu.pipeline_mode<synchronous>, transform_indices = @transform_3, window_bounds = array<i64: 128, 128>}, {pipeline_mode = #tpu.pipeline_mode<synchronous>, transform_indices = @transform_4, window_bounds = array<i64: 1, 128>}, {pipeline_mode = #tpu.pipeline_mode<synchronous>, transform_indices = @transform_5, window_bounds = array<i64: 128, 4>}, {pipeline_mode = #tpu.pipeline_mode<synchronous>, transform_indices = @transform_6, window_bounds = array<i64: 1, 4>}, {transform_indices = @transform_7, window_bounds = array<i64: 8, 4>}]} {
    %c0 = arith.constant 0 : index
    %c0_0 = arith.constant 0 : index
    %0 = vector.load %arg1[%c0, %c0_0] : memref<8x8xf32, #tpu.memory_space<vmem>>, vector<8x8xf32>
    %c0_1 = arith.constant 0 : index
    %c0_2 = arith.constant 0 : index
    %1 = vector.load %arg2[%c0_1, %c0_2] : memref<8x128xf32, #tpu.memory_space<vmem>>, vector<8x128xf32>
    %cst = arith.constant dense<0.000000e+00> : vector<8x128xf32>
    %2 = tpu.matmul %0, %1, %cst {dimension_numbers = #tpu.dot_dimension_numbers<[1], [0], [0], [1], [0, 0, 1, 1], [], []>} : vector<8x8xf32>, vector<8x128xf32>, vector<8x128xf32> -> vector<8x128xf32>
    %c0_3 = arith.constant 0 : index
    %c0_4 = arith.constant 0 : index
    %3 = vector.load %arg3[%c0_3, %c0_4] : memref<1x128xf32, #tpu.memory_space<vmem>>, vector<1x128xf32>
    %4 = vector.broadcast %3 : vector<1x128xf32> to vector<8x128xf32>
    %5 = arith.addf %2, %4 : vector<8x128xf32>
    %cst_5 = arith.constant 0.000000e+00 : f32
    %6 = vector.broadcast %cst_5 : f32 to vector<8x128xf32>
    %7 = arith.maximumf %5, %6 : vector<8x128xf32>
    %c0_6 = arith.constant 0 : index
    %c0_7 = arith.constant 0 : index
    %8 = vector.load %arg4[%c0_6, %c0_7] : memref<128x128xf32, #tpu.memory_space<vmem>>, vector<128x128xf32>
    %cst_8 = arith.constant dense<0.000000e+00> : vector<8x128xf32>
    %9 = tpu.matmul %7, %8, %cst_8 {dimension_numbers = #tpu.dot_dimension_numbers<[1], [0], [0], [1], [0, 0, 1, 1], [], []>} : vector<8x128xf32>, vector<128x128xf32>, vector<8x128xf32> -> vector<8x128xf32>
    %c0_9 = arith.constant 0 : index
    %c0_10 = arith.constant 0 : index
    %10 = vector.load %arg5[%c0_9, %c0_10] : memref<1x128xf32, #tpu.memory_space<vmem>>, vector<1x128xf32>
    %11 = vector.broadcast %10 : vector<1x128xf32> to vector<8x128xf32>
    %12 = arith.addf %9, %11 : vector<8x128xf32>
    %cst_11 = arith.constant 0.000000e+00 : f32
    %13 = vector.broadcast %cst_11 : f32 to vector<8x128xf32>
    %14 = arith.maximumf %12, %13 : vector<8x128xf32>
    %c0_12 = arith.constant 0 : index
    %c0_13 = arith.constant 0 : index
    %15 = vector.load %arg6[%c0_12, %c0_13] : memref<128x4xf32, #tpu.memory_space<vmem>>, vector<128x4xf32>
    %cst_14 = arith.constant dense<0.000000e+00> : vector<8x4xf32>
    %16 = tpu.matmul %14, %15, %cst_14 {dimension_numbers = #tpu.dot_dimension_numbers<[1], [0], [0], [1], [0, 0, 1, 1], [], []>} : vector<8x128xf32>, vector<128x4xf32>, vector<8x4xf32> -> vector<8x4xf32>
    %c0_15 = arith.constant 0 : index
    %c0_16 = arith.constant 0 : index
    %17 = vector.load %arg7[%c0_15, %c0_16] : memref<1x4xf32, #tpu.memory_space<vmem>>, vector<1x4xf32>
    %18 = vector.broadcast %17 : vector<1x4xf32> to vector<8x4xf32>
    %19 = arith.addf %16, %18 : vector<8x4xf32>
    %c0_17 = arith.constant 0 : index
    %c0_18 = arith.constant 0 : index
    %20 = vector.load %arg8[%c0_17, %c0_18] : memref<8x4xf32, #tpu.memory_space<vmem>>, vector<8x4xf32>
    tpu.vector_store %arg8[%c0_17, %c0_18], %19 {strides = array<i32>} : memref<8x4xf32, #tpu.memory_space<vmem>>, vector<8x4xf32>,
    return
  }
  func.func @transform_0(%arg0: i32) -> (i32, i32) {
    %c0_i32 = arith.constant 0 : i32
    %c0_i32_0 = arith.constant 0 : i32
    return %arg0, %c0_i32 : i32, i32
  }
  func.func @transform_1(%arg0: i32) -> (i32, i32) {
    %c0_i32 = arith.constant 0 : i32
    %c0_i32_0 = arith.constant 0 : i32
    %c0_i32_1 = arith.constant 0 : i32
    return %c0_i32, %c0_i32_0 : i32, i32
  }
  func.func @transform_2(%arg0: i32) -> (i32, i32) {
    %c0_i32 = arith.constant 0 : i32
    %c0_i32_0 = arith.constant 0 : i32
    %c0_i32_1 = arith.constant 0 : i32
    return %c0_i32, %c0_i32_0 : i32, i32
  }
  func.func @transform_3(%arg0: i32) -> (i32, i32) {
    %c0_i32 = arith.constant 0 : i32
    %c0_i32_0 = arith.constant 0 : i32
    %c0_i32_1 = arith.constant 0 : i32
    return %c0_i32, %c0_i32_0 : i32, i32
  }
  func.func @transform_4(%arg0: i32) -> (i32, i32) {
    %c0_i32 = arith.constant 0 : i32
    %c0_i32_0 = arith.constant 0 : i32
    %c0_i32_1 = arith.constant 0 : i32
    return %c0_i32, %c0_i32_0 : i32, i32
  }
  func.func @transform_5(%arg0: i32) -> (i32, i32) {
    %c0_i32 = arith.constant 0 : i32
    %c0_i32_0 = arith.constant 0 : i32
    %c0_i32_1 = arith.constant 0 : i32
    return %c0_i32, %c0_i32_0 : i32, i32
  }
  func.func @transform_6(%arg0: i32) -> (i32, i32) {
    %c0_i32 = arith.constant 0 : i32
    %c0_i32_0 = arith.constant 0 : i32
    %c0_i32_1 = arith.constant 0 : i32
    return %c0_i32, %c0_i32_0 : i32, i32
  }
  func.func @transform_7(%arg0: i32) -> (i32, i32) {
    %c0_i32 = arith.constant 0 : i32
    %c0_i32_0 = arith.constant 0 : i32
    return %arg0, %c0_i32 : i32, i32
  }
}

</mosaic_0001>

<llo_original>
// kernel: dqn_forward.1
$region0: #{dqn_forward.1}
  #allocation0 [shape = 'u32[]', space=smem, size = 0x4, offset = 0x4, fixed_abs, tag = 'smem constant byte address 0x4 - core index']
  #allocation1 [shape = 'u32[144,128]{1,0:T(1,128)}', space=vmem, size = 0x12000, scoped, tag = 'internal scratch']
  %s0 = inlined_call_operand.vmem [shape: f32[2,8], index: 0, kind: input, shape index: {}]
  %s1 = inlined_call_operand.vmem [shape: f32[8,128], index: 1, kind: input, shape index: {}]
  %s2 = inlined_call_operand.vmem [shape: f32[1,128], index: 2, kind: input, shape index: {}]
  %s3 = inlined_call_operand.vmem [shape: f32[128,128], index: 3, kind: input, shape index: {}]
  %s4 = inlined_call_operand.vmem [shape: f32[1,128], index: 4, kind: input, shape index: {}]
  %s5 = inlined_call_operand.vmem [shape: f32[128,4], index: 5, kind: input, shape index: {}]
  %s6 = inlined_call_operand.vmem [shape: f32[1,4], index: 6, kind: input, shape index: {}]
  %s7 = inlined_call_operand.hbm [shape: f32[2,4], index: 7, kind: output, shape index: {}]
  %s8 = sld [smem:[#allocation0]]
  $region38: #{dqn_forward.1} parent=0
    _
  %s10 = ssub.s32 1, %s8
  %s11 = scalar_select 0, %s10, %s8
  $region1: #{dqn_forward.1} parent=0
    #allocation2 [shape = 'u8[4096]{0}', space=vmem, size = 0x1000, scoped, tag = 'output window, operand 0, single buffered']
    #allocation3 [shape = 's32[1]{0}', space=sflag, size = 0x4, scoped, tag = 'scoped memory for dqn_forward.1']
    %12 = vsyncpa [#allocation3], 0
    // Predicated region
    $region2: #{dqn_forward.1} parent=1 // pred_check
      _
    $region3: #{dqn_forward.1} parent=1 // pred_check_branch
      %14 = sbr.rel (0) target = $region5
    $region4: #{dqn_forward.1} parent=1 // pred_region
      _
    $region5: #{dqn_forward.1} parent=1 // pred_fallthru
      _
    // Predicated region
    $region6: #{dqn_forward.1} parent=1 // pred_check
      _
    $region7: #{dqn_forward.1} parent=1 // pred_check_branch
      %16 = sbr.rel (0) target = $region9
    $region8: #{dqn_forward.1} parent=1 // pred_region
      _
    $region9: #{dqn_forward.1} parent=1 // pred_fallthru
      _
    // Predicated region
    $region10: #{dqn_forward.1} parent=1 // pred_check
      _
    $region11: #{dqn_forward.1} parent=1 // pred_check_branch
      %18 = sbr.rel (0) target = $region13
    $region12: #{dqn_forward.1} parent=1 // pred_region
      _
    $region13: #{dqn_forward.1} parent=1 // pred_fallthru
      _
    // Predicated region
    $region14: #{dqn_forward.1} parent=1 // pred_check
      _
    $region15: #{dqn_forward.1} parent=1 // pred_check_branch
      %20 = sbr.rel (0) target = $region17
    $region16: #{dqn_forward.1} parent=1 // pred_region
      _
    $region17: #{dqn_forward.1} parent=1 // pred_fallthru
      _
    // Predicated region
    $region18: #{dqn_forward.1} parent=1 // pred_check
      _
    $region19: #{dqn_forward.1} parent=1 // pred_check_branch
      %22 = sbr.rel (0) target = $region21
    $region20: #{dqn_forward.1} parent=1 // pred_region
      _
    $region21: #{dqn_forward.1} parent=1 // pred_fallthru
      _
    // Predicated region
    $region22: #{dqn_forward.1} parent=1 // pred_check
      _
    $region23: #{dqn_forward.1} parent=1 // pred_check_branch
      %24 = sbr.rel (0) target = $region25
    $region24: #{dqn_forward.1} parent=1 // pred_region
      _
    $region25: #{dqn_forward.1} parent=1 // pred_fallthru
      _
    // Predicated region
    $region26: #{dqn_forward.1} parent=1 // pred_check
      _
    $region27: #{dqn_forward.1} parent=1 // pred_check_branch
      %26 = sbr.rel (0) target = $region29
    $region28: #{dqn_forward.1} parent=1 // pred_region
      _
    $region29: #{dqn_forward.1} parent=1 // pred_fallthru
      _
    %v27 = vld [vmem:[%s0] sm:$0xff]
    %v28 = vld [vmem:[%s1] sm:$0xff]
    %v29 = vld [vmem:[%s2] sm:$0x1]
    %v31 = vlaneseq
    %v32 = vshrl.u32 %v31, 7
    %v33 = vsub.s32 0, %v32
    %v34 = vrot.slane %v29, %v33
    %vm36 = vcmask 64512
    %v38 = vsel %vm36, %v27, 0
    %40 = vmatprep.subr.mxu0 0.0
    %41 = vmatpush1.msra.mxu0 %v28
    %42 = vmatprep.subr.mxu0 0.0
    %43 = vmatpush1.msra.mxu0 0.0
    %44 = vmatprep.subr.mxu0 0.0
    %45 = vmatpush1.msra.mxu0 0.0
    %46 = vmatprep.subr.mxu0 0.0
    %47 = vmatpush1.msra.mxu0 0.0
    %48 = vmatprep.subr.mxu0 0.0
    %49 = vmatpush1.msra.mxu0 0.0
    %50 = vmatprep.subr.mxu0 0.0
    %51 = vmatpush1.msra.mxu0 0.0
    %52 = vmatprep.subr.mxu0 0.0
    %53 = vmatpush1.msra.mxu0 0.0
    %54 = vmatprep.subr.mxu0 0.0
    %55 = vmatpush1.msra.mxu0 0.0
    %56 = vmatprep.subr.mxu0 0.0
    %57 = vmatpush1.msra.mxu0 0.0
    %58 = vmatprep.subr.mxu0 0.0
    %59 = vmatpush1.msra.mxu0 0.0
    %60 = vmatprep.subr.mxu0 0.0
    %61 = vmatpush1.msra.mxu0 0.0
    %62 = vmatprep.subr.mxu0 0.0
    %63 = vmatpush1.msra.mxu0 0.0
    %64 = vmatprep.subr.mxu0 0.0
    %65 = vmatpush1.msra.mxu0 0.0
    %66 = vmatprep.subr.mxu0 0.0
    %67 = vmatpush1.msra.mxu0 0.0
    %68 = vmatprep.subr.mxu0 0.0
    %69 = vmatpush1.msra.mxu0 0.0
    %70 = vmatprep.subr.mxu0 0.0
    %71 = vmatpush1.msra.mxu0 0.0
    %72 = vmatprep.subr.mxu0 0.0
    %73 = vmatpush1.msra.mxu0 0.0
    %74 = vmatprep.subr.mxu0 0.0
    %75 = vmatpush1.msra.mxu0 0.0
    %76 = vmatprep.subr.mxu0 0.0
    %77 = vmatpush1.msra.mxu0 0.0
    %78 = vmatprep.subr.mxu0 0.0
    %79 = vmatpush1.msra.mxu0 0.0
    %80 = vmatprep.subr.mxu0 0.0
    %81 = vmatpush1.msra.mxu0 0.0
    %82 = vmatprep.subr.mxu0 0.0
    %83 = vmatpush1.msra.mxu0 0.0
    %84 = vmatprep.subr.mxu0 0.0
    %85 = vmatpush1.msra.mxu0 0.0
    %86 = vmatprep.subr.mxu0 0.0
    %87 = vmatpush1.msra.mxu0 0.0
    %88 = vmatprep.subr.mxu0 0.0
    %89 = vmatpush1.msra.mxu0 0.0
    %90 = vmatprep.subr.mxu0 0.0
    %91 = vmatpush1.msra.mxu0 0.0
    %92 = vmatprep.subr.mxu0 0.0
    %93 = vmatpush1.msra.mxu0 0.0
    %94 = vmatprep.subr.mxu0 0.0
    %95 = vmatpush1.msra.mxu0 0.0
    %96 = vmatprep.subr.mxu0 0.0
    %97 = vmatpush1.msra.mxu0 0.0
    %98 = vmatprep.subr.mxu0 0.0
    %99 = vmatpush1.msra.mxu0 0.0
    %100 = vmatprep.subr.mxu0 0.0
    %101 = vmatpush1.msra.mxu0 0.0
    %102 = vmatprep.subr.mxu0 0.0
    %103 = vmatpush1.msra.mxu0 0.0
    %104 = vmatprep.mubr.f32.mxu0 0.0
    %105 = vmatmul.mubr.f32.gmra.mrb[0].mxu0 %v38
    %v106 = vpop.f32.mrb[0].mxu0
    %v107 = vadd.f32 %v34, %v106
    %v108 = vpop.f32.mrb[0].mxu0
    %109 = vdwg.mxu0
    %v110 = vmax.f32 %v107, 0.0
    %v111 = vld [vmem:[%s3] sm:$0xff]
    %v112 = vld [vmem:[%s3 + $0x8] sm:$0xff]
    %v113 = vld [vmem:[%s3 + $0x10] sm:$0xff]
    %v114 = vld [vmem:[%s3 + $0x18] sm:$0xff]
    %v115 = vld [vmem:[%s3 + $0x20] sm:$0xff]
    %v116 = vld [vmem:[%s3 + $0x28] sm:$0xff]
    %v117 = vld [vmem:[%s3 + $0x30] sm:$0xff]
    %v118 = vld [vmem:[%s3 + $0x38] sm:$0xff]
    %v119 = vld [vmem:[%s3 + $0x40] sm:$0xff]
    %v120 = vld [vmem:[%s3 + $0x48] sm:$0xff]
    %v121 = vld [vmem:[%s3 + $0x50] sm:$0xff]
    %v122 = vld [vmem:[%s3 + $0x58] sm:$0xff]
    %v123 = vld [vmem:[%s3 + $0x60] sm:$0xff]
    %v124 = vld [vmem:[%s3 + $0x68] sm:$0xff]
    %v125 = vld [vmem:[%s3 + $0x70] sm:$0xff]
    %v126 = vld [vmem:[%s3 + $0x78] sm:$0xff]
    %v127 = vld [vmem:[%s4] sm:$0x1]
    %v129 = vlaneseq
    %v130 = vshrl.u32 %v129, 7
    %v131 = vsub.s32 0, %v130
    %v132 = vrot.slane %v127, %v131
    %134 = vmatprep.subr.mxu0 0.0
    %135 = vmatpush1.msra.mxu0 %v111
    %136 = vmatprep.subr.mxu0 0.0
    %137 = vmatpush1.msra.mxu0 %v112
    %138 = vmatprep.subr.mxu0 0.0
    %139 = vmatpush1.msra.mxu0 %v113
    %140 = vmatprep.subr.mxu0 0.0
    %141 = vmatpush1.msra.mxu0 %v114
    %142 = vmatprep.subr.mxu0 0.0
    %143 = vmatpush1.msra.mxu0 %v115
    %144 = vmatprep.subr.mxu0 0.0
    %145 = vmatpush1.msra.mxu0 %v116
    %146 = vmatprep.subr.mxu0 0.0
    %147 = vmatpush1.msra.mxu0 %v117
    %148 = vmatprep.subr.mxu0 0.0
    %149 = vmatpush1.msra.mxu0 %v118
    %150 = vmatprep.subr.mxu0 0.0
    %151 = vmatpush1.msra.mxu0 %v119
    %152 = vmatprep.subr.mxu0 0.0
    %153 = vmatpush1.msra.mxu0 %v120
    %154 = vmatprep.subr.mxu0 0.0
    %155 = vmatpush1.msra.mxu0 %v121
    %156 = vmatprep.subr.mxu0 0.0
    %157 = vmatpush1.msra.mxu0 %v122
    %158 = vmatprep.subr.mxu0 0.0
    %159 = vmatpush1.msra.mxu0 %v123
    %160 = vmatprep.subr.mxu0 0.0
    %161 = vmatpush1.msra.mxu0 %v124
    %162 = vmatprep.subr.mxu0 0.0
    %163 = vmatpush1.msra.mxu0 %v125
    %164 = vmatprep.subr.mxu0 0.0
    %165 = vmatpush1.msra.mxu0 %v126
    %166 = vmatprep.subr.mxu0 0.0
    %167 = vmatpush1.msra.mxu0 0.0
    %168 = vmatprep.subr.mxu0 0.0
    %169 = vmatpush1.msra.mxu0 0.0
    %170 = vmatprep.subr.mxu0 0.0
    %171 = vmatpush1.msra.mxu0 0.0
    %172 = vmatprep.subr.mxu0 0.0
    %173 = vmatpush1.msra.mxu0 0.0
    %174 = vmatprep.subr.mxu0 0.0
    %175 = vmatpush1.msra.mxu0 0.0
    %176 = vmatprep.subr.mxu0 0.0
    %177 = vmatpush1.msra.mxu0 0.0
    %178 = vmatprep.subr.mxu0 0.0
    %179 = vmatpush1.msra.mxu0 0.0
    %180 = vmatprep.subr.mxu0 0.0
    %181 = vmatpush1.msra.mxu0 0.0
    %182 = vmatprep.subr.mxu0 0.0
    %183 = vmatpush1.msra.mxu0 0.0
    %184 = vmatprep.subr.mxu0 0.0
    %185 = vmatpush1.msra.mxu0 0.0
    %186 = vmatprep.subr.mxu0 0.0
    %187 = vmatpush1.msra.mxu0 0.0
    %188 = vmatprep.subr.mxu0 0.0
    %189 = vmatpush1.msra.mxu0 0.0
    %190 = vmatprep.subr.mxu0 0.0
    %191 = vmatpush1.msra.mxu0 0.0
    %192 = vmatprep.subr.mxu0 0.0
    %193 = vmatpush1.msra.mxu0 0.0
    %194 = vmatprep.subr.mxu0 0.0
    %195 = vmatpush1.msra.mxu0 0.0
    %196 = vmatprep.subr.mxu0 0.0
    %197 = vmatpush1.msra.mxu0 0.0
    %198 = vmatprep.mubr.f32.mxu0 0.0
    %199 = vmatmul.mubr.f32.gmra.mrb[0].mxu0 %v110
    %v200 = vpop.f32.mrb[0].mxu0
    %v201 = vadd.f32 %v132, %v200
    %v202 = vpop.f32.mrb[0].mxu0
    %203 = vdwg.mxu0
    %v204 = vmax.f32 %v201, 0.0
    %v205 = vld [vmem:[%s5] sm:$0xff]
    %v206 = vld [vmem:[%s5 + $0x8] sm:$0xff]
    %v207 = vld [vmem:[%s5 + $0x10] sm:$0xff]
    %v208 = vld [vmem:[%s5 + $0x18] sm:$0xff]
    %v209 = vld [vmem:[%s5 + $0x20] sm:$0xff]
    %v210 = vld [vmem:[%s5 + $0x28] sm:$0xff]
    %v211 = vld [vmem:[%s5 + $0x30] sm:$0xff]
    %v212 = vld [vmem:[%s5 + $0x38] sm:$0xff]
    %v213 = vld [vmem:[%s5 + $0x40] sm:$0xff]
    %v214 = vld [vmem:[%s5 + $0x48] sm:$0xff]
    %v215 = vld [vmem:[%s5 + $0x50] sm:$0xff]
    %v216 = vld [vmem:[%s5 + $0x58] sm:$0xff]
    %v217 = vld [vmem:[%s5 + $0x60] sm:$0xff]
    %v218 = vld [vmem:[%s5 + $0x68] sm:$0xff]
    %v219 = vld [vmem:[%s5 + $0x70] sm:$0xff]
    %v220 = vld [vmem:[%s5 + $0x78] sm:$0xff]
    %v221 = vld [vmem:[%s6] sm:$0x1]
    %v223 = vlaneseq
    %v224 = vshrl.u32 %v223, 7
    %v225 = vsub.s32 0, %v224
    %v226 = vrot.slane %v221, %v225
    %228 = vmatprep.subr.mxu0 0.0
    %229 = vmatpush1.msra.mxu0 %v205
    %230 = vmatprep.subr.mxu0 0.0
    %231 = vmatpush1.msra.mxu0 %v206
    %232 = vmatprep.subr.mxu0 0.0
    %233 = vmatpush1.msra.mxu0 %v207
    %234 = vmatprep.subr.mxu0 0.0
    %235 = vmatpush1.msra.mxu0 %v208
    %236 = vmatprep.subr.mxu0 0.0
    %237 = vmatpush1.msra.mxu0 %v209
    %238 = vmatprep.subr.mxu0 0.0
    %239 = vmatpush1.msra.mxu0 %v210
    %240 = vmatprep.subr.mxu0 0.0
    %241 = vmatpush1.msra.mxu0 %v211
    %242 = vmatprep.subr.mxu0 0.0
    %243 = vmatpush1.msra.mxu0 %v212
    %244 = vmatprep.subr.mxu0 0.0
    %245 = vmatpush1.msra.mxu0 %v213
    %246 = vmatprep.subr.mxu0 0.0
    %247 = vmatpush1.msra.mxu0 %v214
    %248 = vmatprep.subr.mxu0 0.0
    %249 = vmatpush1.msra.mxu0 %v215
    %250 = vmatprep.subr.mxu0 0.0
    %251 = vmatpush1.msra.mxu0 %v216
    %252 = vmatprep.subr.mxu0 0.0
    %253 = vmatpush1.msra.mxu0 %v217
    %254 = vmatprep.subr.mxu0 0.0
    %255 = vmatpush1.msra.mxu0 %v218
    %256 = vmatprep.subr.mxu0 0.0
    %257 = vmatpush1.msra.mxu0 %v219
    %258 = vmatprep.subr.mxu0 0.0
    %259 = vmatpush1.msra.mxu0 %v220
    %260 = vmatprep.subr.mxu0 0.0
    %261 = vmatpush1.msra.mxu0 0.0
    %262 = vmatprep.subr.mxu0 0.0
    %263 = vmatpush1.msra.mxu0 0.0
    %264 = vmatprep.subr.mxu0 0.0
    %265 = vmatpush1.msra.mxu0 0.0
    %266 = vmatprep.subr.mxu0 0.0
    %267 = vmatpush1.msra.mxu0 0.0
    %268 = vmatprep.subr.mxu0 0.0
    %269 = vmatpush1.msra.mxu0 0.0
    %270 = vmatprep.subr.mxu0 0.0
    %271 = vmatpush1.msra.mxu0 0.0
    %272 = vmatprep.subr.mxu0 0.0
    %273 = vmatpush1.msra.mxu0 0.0
    %274 = vmatprep.subr.mxu0 0.0
    %275 = vmatpush1.msra.mxu0 0.0
    %276 = vmatprep.subr.mxu0 0.0
    %277 = vmatpush1.msra.mxu0 0.0
    %278 = vmatprep.subr.mxu0 0.0
    %279 = vmatpush1.msra.mxu0 0.0
    %280 = vmatprep.subr.mxu0 0.0
    %281 = vmatpush1.msra.mxu0 0.0
    %282 = vmatprep.subr.mxu0 0.0
    %283 = vmatpush1.msra.mxu0 0.0
    %284 = vmatprep.subr.mxu0 0.0
    %285 = vmatpush1.msra.mxu0 0.0
    %286 = vmatprep.subr.mxu0 0.0
    %287 = vmatpush1.msra.mxu0 0.0
    %288 = vmatprep.subr.mxu0 0.0
    %289 = vmatpush1.msra.mxu0 0.0
    %290 = vmatprep.subr.mxu0 0.0
    %291 = vmatpush1.msra.mxu0 0.0
    %292 = vmatprep.mubr.f32.mxu0 0.0
    %293 = vmatmul.mubr.f32.gmra.mrb[0].mxu0 %v204
    %v294 = vpop.f32.mrb[0].mxu0
    %v295 = vadd.f32 %v226, %v294
    %v296 = vpop.f32.mrb[0].mxu0
    %297 = vdwg.mxu0
    %vm298 = vcmask 31744
    %299 = vst.msk [vmem:[#allocation2] sm:$0xff] %vm298, %v295
    // Predicated region
    $region30: #{dqn_forward.1} parent=1 // pred_check
      _
    $region31: #{dqn_forward.1} parent=1 // pred_check_branch
      %301 = sbr.rel (0) target = $region33
    $region32: #{dqn_forward.1} parent=1 // pred_region
      %s303 = ssub.s32 128, 32
      %304 = vsyncadd [#allocation3], %s303
      %s305 = sshll.u32 [#allocation2], 4
      %s306 = int_to_ptr.vmem [resolvable:$true] %s305
      %311 = dma.vmem_to_hbm [thread:$0]  %s306, 32, %s7, [#allocation3], 32, 32, 2
    $region33: #{dqn_forward.1} parent=1 // pred_fallthru
      _
    // Predicated region
    $region34: #{dqn_forward.1} parent=1 // pred_check
      _
    $region35: #{dqn_forward.1} parent=1 // pred_check_branch
      %313 = sbr.rel (0) target = $region37
    $region36: #{dqn_forward.1} parent=1 // pred_region
      %314 = dma.done [#allocation3], 128
    $region37: #{dqn_forward.1} parent=1 // pred_fallthru
      _
    %315 = vsyncpa [#allocation3], 1

</llo_original>
